<compile_context>
chip_gen: v5e
topology: v5e:2x2
jax: 0.10.0
libtpu: 0.0.40
codegen_flags: <defaults>
</compile_context>

<pallas_src>
import functools
import math

import jax
import jax.numpy as jnp
import numpy as np
from jax.experimental import pallas as pl
from jax.experimental.pallas import tpu as pltpu

NEG_SLOPE = 0.01            # nn.LeakyReLU() default negative_slope
MXU_DTYPE = jnp.float32     # TODO(synk): jnp.bfloat16 on v6e/v7x, relax tol.


def _mm(a, b):
    """MXU matmul with f32 accumulation."""
    return jnp.dot(a.astype(MXU_DTYPE), b.astype(MXU_DTYPE),
                   preferred_element_type=jnp.float32)


# ------------------------- fused whole-network kernel ----------------------- #
def _fused_net_kernel(x_ref, *refs, layers):
    # refs = (w0, b0, sel0, w1, b1, sel1, ..., o_ref)
    #   x_ref : (1, C_in0, L0)      one batch element, time on lanes
    #   w_i   : (K, C_out, C_in)    per-tap weight matrices
    #   b_i   : (C_out, 1)
    #   sel_i : (L_w, L_pool)       0/1 window-start selector (column pick)
    #   o_ref : (1, C_last, L_last)
    n_layers = len(layers)
    o_ref = refs[3 * n_layers]

    x = x_ref[0].astype(jnp.float32)                      # (C_in0, L0)
    for li, cfg in enumerate(layers):
        w_ref = refs[3 * li]
        b_ref = refs[3 * li + 1]
        s_ref = refs[3 * li + 2]
        K, pad, s_c = cfg["K"], cfg["pad"], cfg["s_c"]
        C_in, C_out = cfg["C_in"], cfg["C_out"]
        L_in, L_w = cfg["L_in"], cfg["L_w"]
        pool_k = cfg["pool_k"]

        # Widen working width (rare: only when stride-1 conv output > input).
        if L_w > L_in:
            x = jnp.concatenate(
                [x, jnp.zeros((C_in, L_w - L_in), x.dtype)], axis=1)

        # ---- Conv1d as K per-tap MXU matmuls on lane-rolled activations ----
        lane = jax.lax.broadcasted_iota(jnp.int32, (C_in, L_w), 1)
        acc = jnp.zeros((C_out, L_w), jnp.float32)
        for k in range(K):
            s = k - pad                                   # signed tap offset
            if s == 0:
                xk = x
            else:
                xk = pltpu.roll(x, shift=(-s) % L_w, axis=1)
                # zero the columns that fell outside the original signal
                xk = jnp.where((lane + s >= 0) & (lane + s < L_in), xk, 0.0)
            acc = acc + _mm(w_ref[k], xk)                 # (C_out, L_w)
        acc = acc + b_ref[...]                            # (C_out, 1) bcast

        # ---- LeakyReLU (VPU, f32) ----
        y = jnp.where(acc > 0, acc, NEG_SLOPE * acc)

        # ---- conv stride + MaxPool1d (floor mode) ----
        if cfg["identity_tail"]:
            x = y
            continue
        zmax = y
        for m in range(1, pool_k):                        # window maxima (rolls)
            zmax = jnp.maximum(
                zmax, pltpu.roll(y, shift=(-m * s_c) % L_w, axis=1))
        # Down-select window-start columns with one constant 0/1 selector
        # matmul (avoids lane-strided loads / lane gathers).
        x = _mm(zmax, s_ref[...])                         # (C_out, L_pool)

    o_ref[0] = x.astype(o_ref.dtype)


# ------------------------------ full forward ------------------------------- #
def base_forward(x_ncl, params, conv_layers_args, maxpool_layers_args):
    """Equivalent of Base.forward. x_ncl: (B, C, L); returns (B, C_last, L_last)."""
    B, C0, L0 = x_ncl.shape
    x_f32 = x_ncl.astype(jnp.float32)

    def r8(n):
        return ((n + 7) // 8) * 8

    def r128(n):
        return ((n + 127) // 128) * 128

    layers = []
    flat_inputs = [x_f32]
    in_specs = [pl.BlockSpec((1, C0, L0), lambda i: (i, 0, 0))]
    L = L0
    flops = 0
    param_bytes = 0
    live_bytes = 0
    for (w, b), ca, ma in zip(params,
                              conv_layers_args.values(),
                              maxpool_layers_args.values()):
        C_out, C_in, K = w.shape
        s_c = ca.get("stride", 1)
        pad = ca.get("padding", 0)
        pool_k = ma["kernel_size"]
        pool_s = ma.get("stride", pool_k)

        L_convf = L + 2 * pad - K + 1                    # stride-1 conv length
        L_conv = (L + 2 * pad - K) // s_c + 1            # strided conv length
        L_pool = (L_conv - pool_k) // pool_s + 1         # floor-mode pool length
        L_w = max(L, L_convf)
        identity_tail = (pool_k == 1 and pool_s == 1 and s_c == 1
                         and L_pool == L_w)

        w_koc = jnp.transpose(w, (2, 0, 1))              # (K, C_out, C_in)
        b_col = b.reshape(C_out, 1)
        if identity_tail:
            sel = jnp.ones((1, 1), jnp.float32)          # dummy, unused
        else:
            sel_np = np.zeros((L_w, L_pool), np.float32)
            sel_np[np.arange(L_pool) * (pool_s * s_c), np.arange(L_pool)] = 1.0
            sel = jnp.asarray(sel_np)

        flat_inputs += [w_koc, b_col, sel]
        in_specs += [
            pl.BlockSpec(w_koc.shape, lambda i: (0, 0, 0)),
            pl.BlockSpec(b_col.shape, lambda i: (0, 0)),
            pl.BlockSpec(sel.shape, lambda i: (0, 0)),
        ]
        layers.append(dict(K=K, pad=pad, s_c=s_c, C_in=C_in, C_out=C_out,
                           L_in=L, L_w=L_w, pool_k=pool_k,
                           identity_tail=identity_tail))

        flops += 2 * K * C_in * C_out * L_w + (pool_k - 1) * C_out * L_w
        if not identity_tail:
            flops += 2 * C_out * L_w * L_pool
        param_bytes += 4 * (K * C_in * C_out + C_out + sel.size)
        live_bytes += 4 * 8 * r8(max(C_in, C_out)) * r128(L_w)
        live_bytes += 4 * 2 * (K * r8(C_out) * r128(C_in)
                               + r8(C_out) * r128(1)
                               + r8(sel.shape[0]) * r128(sel.shape[1]))
        L = L_pool

    C_last, L_last = layers[-1]["C_out"], L
    io_bytes = 4 * (B * C0 * L0 + B * C_last * L_last) + param_bytes
    vmem_budget = (2 * 4 * r8(C0) * r128(L0)
                   + 2 * 4 * r8(C_last) * r128(L_last)
                   + live_bytes)
    vmem_limit = min(max(int(vmem_budget * 1.5) + (1 << 20), 4 << 20), 64 << 20)

    kern = functools.partial(_fused_net_kernel, layers=layers)
    out = pl.pallas_call(
        kern,
        out_shape=jax.ShapeDtypeStruct((B, C_last, L_last), jnp.float32),
        grid=(B,),
        in_specs=in_specs,
        out_specs=pl.BlockSpec((1, C_last, L_last), lambda i: (i, 0, 0)),
        compiler_params=pltpu.CompilerParams(
            dimension_semantics=("parallel",),
            vmem_limit_bytes=vmem_limit),
        cost_estimate=pl.CostEstimate(flops=int(B * flops),
                                      transcendentals=0,
                                      bytes_accessed=int(io_bytes)),
    )(*flat_inputs)
    return out                                            # already NCL


# -------------------------- deterministic init ----------------------------- #
def kaiming_uniform(key, shape):
    # nn.init.kaiming_uniform_ defaults: a=0, fan_in, leaky_relu -> gain=sqrt(2)
    c_out, c_in, k = shape
    fan_in = c_in * k
    bound = math.sqrt(2.0) * math.sqrt(3.0 / fan_in)
    return jax.random.uniform(key, shape, jnp.float32, -bound, bound)


# ----------------------------- pure-JAX reference --------------------------- #
def reference_forward(x_ncl, params, conv_layers_args, maxpool_layers_args):
    x = x_ncl
    for (w, b), ca, ma in zip(params,
                              conv_layers_args.values(),
                              maxpool_layers_args.values()):
        y = jax.lax.conv_general_dilated(
            x, w, window_strides=(ca.get("stride", 1),),
            padding=[(ca.get("padding", 0), ca.get("padding", 0))],
            dimension_numbers=("NCH", "OIH", "NCH"))
        y = y + b[None, :, None]
        y = jnp.where(y > 0, y, NEG_SLOPE * y)
        y = jax.lax.reduce_window(
            y, -jnp.inf, jax.lax.max,
            window_dimensions=(1, 1, ma["kernel_size"]),
            window_strides=(1, 1, ma.get("stride", ma["kernel_size"])),
            padding="VALID")
        x = y
    return x


# ---------------------------------- main ----------------------------------- #
if __name__ == "__main__":
    # Small config consistent with the module's constructor arguments.
    conv_layers_args = {
        "layer1": dict(in_channels=4, out_channels=8, kernel_size=3,
                       stride=1, padding=1),
        "layer2": dict(in_channels=8, out_channels=16, kernel_size=3,
                       stride=1, padding=1),
    }
    maxpool_layers_args = {
        "layer1": dict(kernel_size=2, stride=2),
        "layer2": dict(kernel_size=2, stride=2),
    }

    key = jax.random.PRNGKey(0)
    params = []
    for ca in conv_layers_args.values():
        key, wk = jax.random.split(key)
        w = kaiming_uniform(wk, (ca["out_channels"], ca["in_channels"],
                                 ca["kernel_size"]))
        b = jnp.zeros((ca["out_channels"],), jnp.float32)   # zeros_(bias)
        params.append((w, b))

    # Input: (batch=2, channels=4, seq=16), NCL like PyTorch.
    key, xk = jax.random.split(key)
    x = jax.random.normal(xk, (2, 4, 16), jnp.float32)

    out = base_forward(x, params, conv_layers_args, maxpool_layers_args)
    out = jax.block_until_ready(out)

    ref = reference_forward(x, params, conv_layers_args, maxpool_layers_args)
    np.testing.assert_allclose(np.asarray(out), np.asarray(ref),
                               rtol=1e-5, atol=1e-5)
    assert out.shape == (2, 16, 4)   # (B, C_out_last, L_after_two_pools), NCL

    print("KERNEL_OK")
</pallas_src>

<mosaic_0001>
module attributes {stable_mosaic.version = 11 : i64} {
  func.func @_fused_net_kernel(%arg0: i32, %arg1: memref<1x4x16xf32, #tpu.memory_space<vmem>>, %arg2: memref<3x8x4xf32, #tpu.memory_space<vmem>>, %arg3: memref<8x1xf32, #tpu.memory_space<vmem>>, %arg4: memref<16x8xf32, #tpu.memory_space<vmem>>, %arg5: memref<3x16x8xf32, #tpu.memory_space<vmem>>, %arg6: memref<16x1xf32, #tpu.memory_space<vmem>>, %arg7: memref<8x4xf32, #tpu.memory_space<vmem>>, %arg8: memref<1x16x4xf32, #tpu.memory_space<vmem>>) attributes {dimension_semantics = [#tpu.dimension_semantics<parallel>], iteration_bounds = array<i64: 2>, scalar_prefetch = 0 : i64, scratch_operands = 0 : i64, tpu.core_type = #tpu.core_type<tc>, window_params = [{transform_indices = @transform_0, window_bounds = array<i64: 1, 4, 16>}, {pipeline_mode = #tpu.pipeline_mode<synchronous>, transform_indices = @transform_1, window_bounds = array<i64: 3, 8, 4>}, {pipeline_mode = #tpu.pipeline_mode<synchronous>, transform_indices = @transform_2, window_bounds = array<i64: 8, 1>}, {pipeline_mode = #tpu.pipeline_mode<synchronous>, transform_indices = @transform_3, window_bounds = array<i64: 16, 8>}, {pipeline_mode = #tpu.pipeline_mode<synchronous>, transform_indices = @transform_4, window_bounds = array<i64: 3, 16, 8>}, {pipeline_mode = #tpu.pipeline_mode<synchronous>, transform_indices = @transform_5, window_bounds = array<i64: 16, 1>}, {pipeline_mode = #tpu.pipeline_mode<synchronous>, transform_indices = @transform_6, window_bounds = array<i64: 8, 4>}, {transform_indices = @transform_7, window_bounds = array<i64: 1, 16, 4>}]} {
    %c0 = arith.constant 0 : index
    %c0_0 = arith.constant 0 : index
    %c0_1 = arith.constant 0 : index
    %0 = vector.load %arg1[%c0, %c0_0, %c0_1] : memref<1x4x16xf32, #tpu.memory_space<vmem>>, vector<1x4x16xf32>
    %1 = vector.shape_cast %0 : vector<1x4x16xf32> to vector<4x16xf32>
    %2 = tpu.iota {dimensions = array<i32: 1>} : vector<4x16xi32>
    %cst = arith.constant 0.000000e+00 : f32
    %3 = vector.broadcast %cst : f32 to vector<8x16xf32>
    %c1_i32 = arith.constant 1 : i32
    %4 = tpu.dynamic_rotate %1 by %c1_i32 dim 1 : vector<4x16xf32>, i32 -> vector<4x16xf32>
    %c-1_i32 = arith.constant -1 : i32
    %5 = vector.broadcast %c-1_i32 : i32 to vector<4x16xi32>
    %6 = arith.addi %2, %5 : vector<4x16xi32>
    %c0_i32 = arith.constant 0 : i32
    %7 = vector.broadcast %c0_i32 : i32 to vector<4x16xi32>
    %8 = arith.cmpi sge, %6, %7 : vector<4x16xi32>
    %c-1_i32_2 = arith.constant -1 : i32
    %9 = vector.broadcast %c-1_i32_2 : i32 to vector<4x16xi32>
    %10 = arith.addi %2, %9 : vector<4x16xi32>
    %c16_i32 = arith.constant 16 : i32
    %11 = vector.broadcast %c16_i32 : i32 to vector<4x16xi32>
    %12 = arith.cmpi slt, %10, %11 : vector<4x16xi32>
    %13 = arith.andi %8, %12 : vector<4x16xi1>
    %cst_3 = arith.constant 0.000000e+00 : f32
    %14 = vector.broadcast %cst_3 : f32 to vector<4x16xf32>
    %15 = arith.select %13, %4, %14 : vector<4x16xi1>, vector<4x16xf32>
    %c0_4 = arith.constant 0 : index
    %c0_5 = arith.constant 0 : index
    %c0_6 = arith.constant 0 : index
    %16 = vector.load %arg2[%c0_4, %c0_5, %c0_6] : memref<3x8x4xf32, #tpu.memory_space<vmem>>, vector<1x8x4xf32>
    %17 = vector.shape_cast %16 : vector<1x8x4xf32> to vector<8x4xf32>
    %cst_7 = arith.constant dense<0.000000e+00> : vector<8x16xf32>
    %18 = tpu.matmul %17, %15, %cst_7 {dimension_numbers = #tpu.dot_dimension_numbers<[1], [0], [0], [1], [0, 0, 1, 1], [], []>} : vector<8x4xf32>, vector<4x16xf32>, vector<8x16xf32> -> vector<8x16xf32>
    %19 = arith.addf %3, %18 : vector<8x16xf32>
    %c1 = arith.constant 1 : index
    %c0_8 = arith.constant 0 : index
    %c0_9 = arith.constant 0 : index
    %20 = vector.load %arg2[%c1, %c0_8, %c0_9] : memref<3x8x4xf32, #tpu.memory_space<vmem>>, vector<1x8x4xf32>
    %21 = vector.shape_cast %20 : vector<1x8x4xf32> to vector<8x4xf32>
    %cst_10 = arith.constant dense<0.000000e+00> : vector<8x16xf32>
    %22 = tpu.matmul %21, %1, %cst_10 {dimension_numbers = #tpu.dot_dimension_numbers<[1], [0], [0], [1], [0, 0, 1, 1], [], []>} : vector<8x4xf32>, vector<4x16xf32>, vector<8x16xf32> -> vector<8x16xf32>
    %23 = arith.addf %19, %22 : vector<8x16xf32>
    %c15_i32 = arith.constant 15 : i32
    %24 = tpu.dynamic_rotate %1 by %c15_i32 dim 1 : vector<4x16xf32>, i32 -> vector<4x16xf32>
    %c1_i32_11 = arith.constant 1 : i32
    %25 = vector.broadcast %c1_i32_11 : i32 to vector<4x16xi32>
    %26 = arith.addi %2, %25 : vector<4x16xi32>
    %c0_i32_12 = arith.constant 0 : i32
    %27 = vector.broadcast %c0_i32_12 : i32 to vector<4x16xi32>
    %28 = arith.cmpi sge, %26, %27 : vector<4x16xi32>
    %c1_i32_13 = arith.constant 1 : i32
    %29 = vector.broadcast %c1_i32_13 : i32 to vector<4x16xi32>
    %30 = arith.addi %2, %29 : vector<4x16xi32>
    %c16_i32_14 = arith.constant 16 : i32
    %31 = vector.broadcast %c16_i32_14 : i32 to vector<4x16xi32>
    %32 = arith.cmpi slt, %30, %31 : vector<4x16xi32>
    %33 = arith.andi %28, %32 : vector<4x16xi1>
    %cst_15 = arith.constant 0.000000e+00 : f32
    %34 = vector.broadcast %cst_15 : f32 to vector<4x16xf32>
    %35 = arith.select %33, %24, %34 : vector<4x16xi1>, vector<4x16xf32>
    %c2 = arith.constant 2 : index
    %c0_16 = arith.constant 0 : index
    %c0_17 = arith.constant 0 : index
    %36 = vector.load %arg2[%c2, %c0_16, %c0_17] : memref<3x8x4xf32, #tpu.memory_space<vmem>>, vector<1x8x4xf32>
    %37 = vector.shape_cast %36 : vector<1x8x4xf32> to vector<8x4xf32>
    %cst_18 = arith.constant dense<0.000000e+00> : vector<8x16xf32>
    %38 = tpu.matmul %37, %35, %cst_18 {dimension_numbers = #tpu.dot_dimension_numbers<[1], [0], [0], [1], [0, 0, 1, 1], [], []>} : vector<8x4xf32>, vector<4x16xf32>, vector<8x16xf32> -> vector<8x16xf32>
    %39 = arith.addf %23, %38 : vector<8x16xf32>
    %c0_19 = arith.constant 0 : index
    %c0_20 = arith.constant 0 : index
    %40 = vector.load %arg3[%c0_19, %c0_20] : memref<8x1xf32, #tpu.memory_space<vmem>>, vector<8x1xf32>
    %41 = vector.broadcast %40 : vector<8x1xf32> to vector<8x16xf32>
    %42 = arith.addf %39, %41 : vector<8x16xf32>
    %cst_21 = arith.constant 0.000000e+00 : f32
    %43 = vector.broadcast %cst_21 : f32 to vector<8x16xf32>
    %44 = arith.cmpf ogt, %42, %43 : vector<8x16xf32>
    %cst_22 = arith.constant 0.00999999977 : f32
    %45 = vector.broadcast %cst_22 : f32 to vector<8x16xf32>
    %46 = arith.mulf %45, %42 : vector<8x16xf32>
    %47 = arith.select %44, %42, %46 : vector<8x16xi1>, vector<8x16xf32>
    %c15_i32_23 = arith.constant 15 : i32
    %48 = tpu.dynamic_rotate %47 by %c15_i32_23 dim 1 : vector<8x16xf32>, i32 -> vector<8x16xf32>
    %49 = arith.maximumf %47, %48 : vector<8x16xf32>
    %c0_24 = arith.constant 0 : index
    %c0_25 = arith.constant 0 : index
    %50 = vector.load %arg4[%c0_24, %c0_25] : memref<16x8xf32, #tpu.memory_space<vmem>>, vector<16x8xf32>
    %cst_26 = arith.constant dense<0.000000e+00> : vector<8x8xf32>
    %51 = tpu.matmul %49, %50, %cst_26 {dimension_numbers = #tpu.dot_dimension_numbers<[1], [0], [0], [1], [0, 0, 1, 1], [], []>} : vector<8x16xf32>, vector<16x8xf32>, vector<8x8xf32> -> vector<8x8xf32>
    %52 = tpu.iota {dimensions = array<i32: 1>} : vector<8x8xi32>
    %cst_27 = arith.constant 0.000000e+00 : f32
    %53 = vector.broadcast %cst_27 : f32 to vector<16x8xf32>
    %c1_i32_28 = arith.constant 1 : i32
    %54 = tpu.dynamic_rotate %51 by %c1_i32_28 dim 1 : vector<8x8xf32>, i32 -> vector<8x8xf32>
    %c-1_i32_29 = arith.constant -1 : i32
    %55 = vector.broadcast %c-1_i32_29 : i32 to vector<8x8xi32>
    %56 = arith.addi %52, %55 : vector<8x8xi32>
    %c0_i32_30 = arith.constant 0 : i32
    %57 = vector.broadcast %c0_i32_30 : i32 to vector<8x8xi32>
    %58 = arith.cmpi sge, %56, %57 : vector<8x8xi32>
    %c-1_i32_31 = arith.constant -1 : i32
    %59 = vector.broadcast %c-1_i32_31 : i32 to vector<8x8xi32>
    %60 = arith.addi %52, %59 : vector<8x8xi32>
    %c8_i32 = arith.constant 8 : i32
    %61 = vector.broadcast %c8_i32 : i32 to vector<8x8xi32>
    %62 = arith.cmpi slt, %60, %61 : vector<8x8xi32>
    %63 = arith.andi %58, %62 : vector<8x8xi1>
    %cst_32 = arith.constant 0.000000e+00 : f32
    %64 = vector.broadcast %cst_32 : f32 to vector<8x8xf32>
    %65 = arith.select %63, %54, %64 : vector<8x8xi1>, vector<8x8xf32>
    %c0_33 = arith.constant 0 : index
    %c0_34 = arith.constant 0 : index
    %c0_35 = arith.constant 0 : index
    %66 = vector.load %arg5[%c0_33, %c0_34, %c0_35] : memref<3x16x8xf32, #tpu.memory_space<vmem>>, vector<1x16x8xf32>
    %67 = vector.shape_cast %66 : vector<1x16x8xf32> to vector<16x8xf32>
    %cst_36 = arith.constant dense<0.000000e+00> : vector<16x8xf32>
    %68 = tpu.matmul %67, %65, %cst_36 {dimension_numbers = #tpu.dot_dimension_numbers<[1], [0], [0], [1], [0, 0, 1, 1], [], []>} : vector<16x8xf32>, vector<8x8xf32>, vector<16x8xf32> -> vector<16x8xf32>
    %69 = arith.addf %53, %68 : vector<16x8xf32>
    %c1_37 = arith.constant 1 : index
    %c0_38 = arith.constant 0 : index
    %c0_39 = arith.constant 0 : index
    %70 = vector.load %arg5[%c1_37, %c0_38, %c0_39] : memref<3x16x8xf32, #tpu.memory_space<vmem>>, vector<1x16x8xf32>
    %71 = vector.shape_cast %70 : vector<1x16x8xf32> to vector<16x8xf32>
    %cst_40 = arith.constant dense<0.000000e+00> : vector<16x8xf32>
    %72 = tpu.matmul %71, %51, %cst_40 {dimension_numbers = #tpu.dot_dimension_numbers<[1], [0], [0], [1], [0, 0, 1, 1], [], []>} : vector<16x8xf32>, vector<8x8xf32>, vector<16x8xf32> -> vector<16x8xf32>
    %73 = arith.addf %69, %72 : vector<16x8xf32>
    %c7_i32 = arith.constant 7 : i32
    %74 = tpu.dynamic_rotate %51 by %c7_i32 dim 1 : vector<8x8xf32>, i32 -> vector<8x8xf32>
    %c1_i32_41 = arith.constant 1 : i32
    %75 = vector.broadcast %c1_i32_41 : i32 to vector<8x8xi32>
    %76 = arith.addi %52, %75 : vector<8x8xi32>
    %c0_i32_42 = arith.constant 0 : i32
    %77 = vector.broadcast %c0_i32_42 : i32 to vector<8x8xi32>
    %78 = arith.cmpi sge, %76, %77 : vector<8x8xi32>
    %c1_i32_43 = arith.constant 1 : i32
    %79 = vector.broadcast %c1_i32_43 : i32 to vector<8x8xi32>
    %80 = arith.addi %52, %79 : vector<8x8xi32>
    %c8_i32_44 = arith.constant 8 : i32
    %81 = vector.broadcast %c8_i32_44 : i32 to vector<8x8xi32>
    %82 = arith.cmpi slt, %80, %81 : vector<8x8xi32>
    %83 = arith.andi %78, %82 : vector<8x8xi1>
    %cst_45 = arith.constant 0.000000e+00 : f32
    %84 = vector.broadcast %cst_45 : f32 to vector<8x8xf32>
    %85 = arith.select %83, %74, %84 : vector<8x8xi1>, vector<8x8xf32>
    %c2_46 = arith.constant 2 : index
    %c0_47 = arith.constant 0 : index
    %c0_48 = arith.constant 0 : index
    %86 = vector.load %arg5[%c2_46, %c0_47, %c0_48] : memref<3x16x8xf32, #tpu.memory_space<vmem>>, vector<1x16x8xf32>
    %87 = vector.shape_cast %86 : vector<1x16x8xf32> to vector<16x8xf32>
    %cst_49 = arith.constant dense<0.000000e+00> : vector<16x8xf32>
    %88 = tpu.matmul %87, %85, %cst_49 {dimension_numbers = #tpu.dot_dimension_numbers<[1], [0], [0], [1], [0, 0, 1, 1], [], []>} : vector<16x8xf32>, vector<8x8xf32>, vector<16x8xf32> -> vector<16x8xf32>
    %89 = arith.addf %73, %88 : vector<16x8xf32>
    %c0_50 = arith.constant 0 : index
    %c0_51 = arith.constant 0 : index
    %90 = vector.load %arg6[%c0_50, %c0_51] : memref<16x1xf32, #tpu.memory_space<vmem>>, vector<16x1xf32>
    %91 = vector.broadcast %90 : vector<16x1xf32> to vector<16x8xf32>
    %92 = arith.addf %89, %91 : vector<16x8xf32>
    %cst_52 = arith.constant 0.000000e+00 : f32
    %93 = vector.broadcast %cst_52 : f32 to vector<16x8xf32>
    %94 = arith.cmpf ogt, %92, %93 : vector<16x8xf32>
    %cst_53 = arith.constant 0.00999999977 : f32
    %95 = vector.broadcast %cst_53 : f32 to vector<16x8xf32>
    %96 = arith.mulf %95, %92 : vector<16x8xf32>
    %97 = arith.select %94, %92, %96 : vector<16x8xi1>, vector<16x8xf32>
    %c7_i32_54 = arith.constant 7 : i32
    %98 = tpu.dynamic_rotate %97 by %c7_i32_54 dim 1 : vector<16x8xf32>, i32 -> vector<16x8xf32>
    %99 = arith.maximumf %97, %98 : vector<16x8xf32>
    %c0_55 = arith.constant 0 : index
    %c0_56 = arith.constant 0 : index
    %100 = vector.load %arg7[%c0_55, %c0_56] : memref<8x4xf32, #tpu.memory_space<vmem>>, vector<8x4xf32>
    %cst_57 = arith.constant dense<0.000000e+00> : vector<16x4xf32>
    %101 = tpu.matmul %99, %100, %cst_57 {dimension_numbers = #tpu.dot_dimension_numbers<[1], [0], [0], [1], [0, 0, 1, 1], [], []>} : vector<16x8xf32>, vector<8x4xf32>, vector<16x4xf32> -> vector<16x4xf32>
    %c0_58 = arith.constant 0 : index
    %c0_59 = arith.constant 0 : index
    %c0_60 = arith.constant 0 : index
    %102 = vector.load %arg8[%c0_58, %c0_59, %c0_60] : memref<1x16x4xf32, #tpu.memory_space<vmem>>, vector<1x16x4xf32>
    %103 = vector.shape_cast %102 : vector<1x16x4xf32> to vector<16x4xf32>
    %104 = vector.shape_cast %101 : vector<16x4xf32> to vector<1x16x4xf32>
    tpu.vector_store %arg8[%c0_58, %c0_59, %c0_60], %104 {strides = array<i32>} : memref<1x16x4xf32, #tpu.memory_space<vmem>>, vector<1x16x4xf32>,
    return
  }
  func.func @transform_0(%arg0: i32) -> (i32, i32, i32) {
    %c0_i32 = arith.constant 0 : i32
    %c0_i32_0 = arith.constant 0 : i32
    %c0_i32_1 = arith.constant 0 : i32
    return %arg0, %c0_i32, %c0_i32_0 : i32, i32, i32
  }
  func.func @transform_1(%arg0: i32) -> (i32, i32, i32) {
    %c0_i32 = arith.constant 0 : i32
    %c0_i32_0 = arith.constant 0 : i32
    %c0_i32_1 = arith.constant 0 : i32
    %c0_i32_2 = arith.constant 0 : i32
    return %c0_i32, %c0_i32_0, %c0_i32_1 : i32, i32, i32
  }
  func.func @transform_2(%arg0: i32) -> (i32, i32) {
    %c0_i32 = arith.constant 0 : i32
    %c0_i32_0 = arith.constant 0 : i32
    %c0_i32_1 = arith.constant 0 : i32
    return %c0_i32, %c0_i32_0 : i32, i32
  }
  func.func @transform_3(%arg0: i32) -> (i32, i32) {
    %c0_i32 = arith.constant 0 : i32
    %c0_i32_0 = arith.constant 0 : i32
    %c0_i32_1 = arith.constant 0 : i32
    return %c0_i32, %c0_i32_0 : i32, i32
  }
  func.func @transform_4(%arg0: i32) -> (i32, i32, i32) {
    %c0_i32 = arith.constant 0 : i32
    %c0_i32_0 = arith.constant 0 : i32
    %c0_i32_1 = arith.constant 0 : i32
    %c0_i32_2 = arith.constant 0 : i32
    return %c0_i32, %c0_i32_0, %c0_i32_1 : i32, i32, i32
  }
  func.func @transform_5(%arg0: i32) -> (i32, i32) {
    %c0_i32 = arith.constant 0 : i32
    %c0_i32_0 = arith.constant 0 : i32
    %c0_i32_1 = arith.constant 0 : i32
    return %c0_i32, %c0_i32_0 : i32, i32
  }
  func.func @transform_6(%arg0: i32) -> (i32, i32) {
    %c0_i32 = arith.constant 0 : i32
    %c0_i32_0 = arith.constant 0 : i32
    %c0_i32_1 = arith.constant 0 : i32
    return %c0_i32, %c0_i32_0 : i32, i32
  }
  func.func @transform_7(%arg0: i32) -> (i32, i32, i32) {
    %c0_i32 = arith.constant 0 : i32
    %c0_i32_0 = arith.constant 0 : i32
    %c0_i32_1 = arith.constant 0 : i32
    return %arg0, %c0_i32, %c0_i32_0 : i32, i32, i32
  }
}

</mosaic_0001>

<llo_original>
// kernel: tpu_custom_call.1
$region0: #{tpu_custom_call.1}
  #allocation0 [shape = 'u32[]', space=smem, size = 0x4, offset = 0x4, fixed_abs, tag = 'smem constant byte address 0x4 - core index']
  #allocation1 [shape = 'u32[72,128]{1,0:T(1,128)}', space=vmem, size = 0x9000, scoped, tag = 'internal scratch']
  %s0 = inlined_call_operand.vmem [shape: f32[2,4,16], index: 0, kind: input, shape index: {}]
  %s1 = inlined_call_operand.vmem [shape: f32[3,8,4], index: 1, kind: input, shape index: {}]
  %s2 = inlined_call_operand.vmem [shape: f32[8,1], index: 2, kind: input, shape index: {}]
  %s3 = inlined_call_operand.vmem [shape: f32[16,8], index: 3, kind: input, shape index: {}]
  %s4 = inlined_call_operand.vmem [shape: f32[3,16,8], index: 4, kind: input, shape index: {}]
  %s5 = inlined_call_operand.vmem [shape: f32[16,1], index: 5, kind: input, shape index: {}]
  %s6 = inlined_call_operand.vmem [shape: f32[8,4], index: 6, kind: input, shape index: {}]
  %s7 = inlined_call_operand.vmem [shape: f32[2,16,4], index: 7, kind: output, shape index: {}]
  %s8 = sld [smem:[#allocation0]]
  $region61: #{tpu_custom_call.1} parent=0
    _
  %s10 = ssub.s32 1, %s8
  %s11 = scalar_select 0, %s10, %s8
  loop: start=0, step=1, limit=4
  $region2: #{tpu_custom_call.1} parent=0 // loop_pre_header
    _
  $region3: #{tpu_custom_call.1} parent=0 // loop_header
    %s13 = sphi 0, %s17
    %p14 = scmp.ge.s32.totalorder %s13, 4
    %s23 = sphi 0, %s25
    %s26 = sphi 0, %s23
    %s27 = sphi 0, %s26
    %s43 = sphi 0, %s27
    %s47 = sphi 0, %s47
    %s49 = sphi 0, %s47
    %s50 = sphi 0, %s49
    %s64 = sphi 0, %s50
    %s68 = sphi 0, %s68
    %s70 = sphi 0, %s68
    %s71 = sphi 0, %s70
    %s85 = sphi 0, %s71
    %s89 = sphi 0, %s89
    %s91 = sphi 0, %s89
    %s92 = sphi 0, %s91
    %s106 = sphi 0, %s92
    %s110 = sphi 0, %s110
    %s112 = sphi 0, %s110
    %s113 = sphi 0, %s112
    %s127 = sphi 0, %s113
    %s131 = sphi 0, %s131
    %s133 = sphi 0, %s131
    %s134 = sphi 0, %s133
    %s148 = sphi 0, %s134
    %s152 = sphi 0, %s152
    %s154 = sphi 0, %s152
    %s155 = sphi 0, %s154
    %s169 = sphi 0, %s155
    %s175 = sphi 0, %s177
    %s178 = sphi 0, %s175
    %s179 = sphi 0, %s178
    %s195 = sphi 0, %s179
  $region4: #{tpu_custom_call.1} parent=0 // loop_header_branch
    %16 = sbr.rel (%p14) target = $region8
  $region5: #{tpu_custom_call.1} parent=0 // loop_body
    %s18 = ssub.s32 %s13, 1
    %s19 = ssub.s32 %s13, 2
    %s20 = sadd.s32 %s13, 1
    %s21 = ssub.s32 %s13, %s20
    %p22 = scmp.eq.s32.totalorder %s21, 0
    %s24 = sadd.s32 %s23, 1
    %s25 = scalar_select %p22, %s23, %s24
    %p28 = pneg %p22
    %p29 = scmp.eq.s32.totalorder %s13, 1
    %p30 = por %p28, %p29
    %p31 = scmp.ne.s32.totalorder %s23, %s26
    %p32 = scmp.eq.s32.totalorder %s13, 0
    %p33 = por %p31, %p32
    %p34 = scmp.ne.s32.totalorder %s23, %s26
    %p35 = scmp.eq.s32.totalorder %s18, 1
    %p36 = por %p34, %p35
    %p37 = scmp.ne.s32.totalorder %s26, %s27
    %p38 = scmp.eq.s32.totalorder %s18, 0
    %p39 = por %p37, %p38
    %p40 = scmp.ne.s32.totalorder %s26, %s27
    %p41 = scmp.eq.s32.totalorder %s19, 1
    %p42 = por %p40, %p41
    %p44 = scmp.ne.s32.totalorder %s27, %s43
    %p45 = scmp.eq.s32.totalorder %s19, 0
    %p46 = por %p44, %p45
    %s48 = sadd.s32 %s47, 1
    %p51 = scmp.eq.s32.totalorder %s13, 1
    %p52 = scmp.ne.s32.totalorder %s47, %s49
    %p53 = scmp.eq.s32.totalorder %s13, 0
    %p54 = por %p52, %p53
    %p55 = scmp.ne.s32.totalorder %s47, %s49
    %p56 = scmp.eq.s32.totalorder %s18, 1
    %p57 = por %p55, %p56
    %p58 = scmp.ne.s32.totalorder %s49, %s50
    %p59 = scmp.eq.s32.totalorder %s18, 0
    %p60 = por %p58, %p59
    %p61 = scmp.ne.s32.totalorder %s49, %s50
    %p62 = scmp.eq.s32.totalorder %s19, 1
    %p63 = por %p61, %p62
    %p65 = scmp.ne.s32.totalorder %s50, %s64
    %p66 = scmp.eq.s32.totalorder %s19, 0
    %p67 = por %p65, %p66
    %s69 = sadd.s32 %s68, 1
    %p72 = scmp.eq.s32.totalorder %s13, 1
    %p73 = scmp.ne.s32.totalorder %s68, %s70
    %p74 = scmp.eq.s32.totalorder %s13, 0
    %p75 = por %p73, %p74
    %p76 = scmp.ne.s32.totalorder %s68, %s70
    %p77 = scmp.eq.s32.totalorder %s18, 1
    %p78 = por %p76, %p77
    %p79 = scmp.ne.s32.totalorder %s70, %s71
    %p80 = scmp.eq.s32.totalorder %s18, 0
    %p81 = por %p79, %p80
    %p82 = scmp.ne.s32.totalorder %s70, %s71
    %p83 = scmp.eq.s32.totalorder %s19, 1
    %p84 = por %p82, %p83
    %p86 = scmp.ne.s32.totalorder %s71, %s85
    %p87 = scmp.eq.s32.totalorder %s19, 0
    %p88 = por %p86, %p87
    %s90 = sadd.s32 %s89, 1
    %p93 = scmp.eq.s32.totalorder %s13, 1
    %p94 = scmp.ne.s32.totalorder %s89, %s91
    %p95 = scmp.eq.s32.totalorder %s13, 0
    %p96 = por %p94, %p95
    %p97 = scmp.ne.s32.totalorder %s89, %s91
    %p98 = scmp.eq.s32.totalorder %s18, 1
    %p99 = por %p97, %p98
    %p100 = scmp.ne.s32.totalorder %s91, %s92
    %p101 = scmp.eq.s32.totalorder %s18, 0
    %p102 = por %p100, %p101
    %p103 = scmp.ne.s32.totalorder %s91, %s92
    %p104 = scmp.eq.s32.totalorder %s19, 1
    %p105 = por %p103, %p104
    %p107 = scmp.ne.s32.totalorder %s92, %s106
    %p108 = scmp.eq.s32.totalorder %s19, 0
    %p109 = por %p107, %p108
    %s111 = sadd.s32 %s110, 1
    %p114 = scmp.eq.s32.totalorder %s13, 1
    %p115 = scmp.ne.s32.totalorder %s110, %s112
    %p116 = scmp.eq.s32.totalorder %s13, 0
    %p117 = por %p115, %p116
    %p118 = scmp.ne.s32.totalorder %s110, %s112
    %p119 = scmp.eq.s32.totalorder %s18, 1
    %p120 = por %p118, %p119
    %p121 = scmp.ne.s32.totalorder %s112, %s113
    %p122 = scmp.eq.s32.totalorder %s18, 0
    %p123 = por %p121, %p122
    %p124 = scmp.ne.s32.totalorder %s112, %s113
    %p125 = scmp.eq.s32.totalorder %s19, 1
    %p126 = por %p124, %p125
    %p128 = scmp.ne.s32.totalorder %s113, %s127
    %p129 = scmp.eq.s32.totalorder %s19, 0
    %p130 = por %p128, %p129
    %s132 = sadd.s32 %s131, 1
    %p135 = scmp.eq.s32.totalorder %s13, 1
    %p136 = scmp.ne.s32.totalorder %s131, %s133
    %p137 = scmp.eq.s32.totalorder %s13, 0
    %p138 = por %p136, %p137
    %p139 = scmp.ne.s32.totalorder %s131, %s133
    %p140 = scmp.eq.s32.totalorder %s18, 1
    %p141 = por %p139, %p140
    %p142 = scmp.ne.s32.totalorder %s133, %s134
    %p143 = scmp.eq.s32.totalorder %s18, 0
    %p144 = por %p142, %p143
    %p145 = scmp.ne.s32.totalorder %s133, %s134
    %p146 = scmp.eq.s32.totalorder %s19, 1
    %p147 = por %p145, %p146
    %p149 = scmp.ne.s32.totalorder %s134, %s148
    %p150 = scmp.eq.s32.totalorder %s19, 0
    %p151 = por %p149, %p150
    %s153 = sadd.s32 %s152, 1
    %p156 = scmp.eq.s32.totalorder %s13, 1
    %p157 = scmp.ne.s32.totalorder %s152, %s154
    %p158 = scmp.eq.s32.totalorder %s13, 0
    %p159 = por %p157, %p158
    %p160 = scmp.ne.s32.totalorder %s152, %s154
    %p161 = scmp.eq.s32.totalorder %s18, 1
    %p162 = por %p160, %p161
    %p163 = scmp.ne.s32.totalorder %s154, %s155
    %p164 = scmp.eq.s32.totalorder %s18, 0
    %p165 = por %p163, %p164
    %p166 = scmp.ne.s32.totalorder %s154, %s155
    %p167 = scmp.eq.s32.totalorder %s19, 1
    %p168 = por %p166, %p167
    %p170 = scmp.ne.s32.totalorder %s155, %s169
    %p171 = scmp.eq.s32.totalorder %s19, 0
    %p172 = por %p170, %p171
    %s173 = ssub.s32 %s13, %s20
    %p174 = scmp.eq.s32.totalorder %s173, 0
    %s176 = sadd.s32 %s175, 1
    %s177 = scalar_select %p174, %s175, %s176
    %p180 = pneg %p174
    %p181 = scmp.eq.s32.totalorder %s13, 1
    %p182 = por %p180, %p181
    %p183 = scmp.ne.s32.totalorder %s175, %s178
    %p184 = scmp.eq.s32.totalorder %s13, 0
    %p185 = por %p183, %p184
    %p186 = scmp.ne.s32.totalorder %s175, %s178
    %p187 = scmp.eq.s32.totalorder %s18, 1
    %p188 = por %p186, %p187
    %p189 = scmp.ne.s32.totalorder %s178, %s179
    %p190 = scmp.eq.s32.totalorder %s18, 0
    %p191 = por %p189, %p190
    %p192 = scmp.ne.s32.totalorder %s178, %s179
    %p193 = scmp.eq.s32.totalorder %s19, 1
    %p194 = por %p192, %p193
    %p196 = scmp.ne.s32.totalorder %s179, %s195
    %p197 = scmp.eq.s32.totalorder %s19, 0
    %p198 = por %p196, %p197
    %p199 = scmp.le.s32.totalorder 1, %s13
    %p200 = scmp.lt.s32.totalorder %s13, 3
    %p201 = pnand %p199, %p200
    %p202 = pneg %p201
    // Predicated region
    $region9: #{tpu_custom_call.1} parent=5 // pred_check
      _
    $region10: #{tpu_custom_call.1} parent=5 // pred_check_branch
      %204 = sbr.rel (%p201) target = $region12
    $region11: #{tpu_custom_call.1} parent=5 // pred_region
      %s205 = ssub.s32 %s13, 1
      // Predicated region
      $region13: #{tpu_custom_call.1} parent=11 // pred_check
        %p206 = pneg %p60
      $region14: #{tpu_custom_call.1} parent=11 // pred_check_branch
        %208 = sbr.rel (%p206) target = $region16
      $region15: #{tpu_custom_call.1} parent=11 // pred_region
        _
      $region16: #{tpu_custom_call.1} parent=11 // pred_fallthru
        _
      // Predicated region
      $region17: #{tpu_custom_call.1} parent=11 // pred_check
        %p209 = pneg %p81
      $region18: #{tpu_custom_call.1} parent=11 // pred_check_branch
        %211 = sbr.rel (%p209) target = $region20
      $region19: #{tpu_custom_call.1} parent=11 // pred_region
        _
      $region20: #{tpu_custom_call.1} parent=11 // pred_fallthru
        _
      // Predicated region
      $region21: #{tpu_custom_call.1} parent=11 // pred_check
        %p212 = pneg %p102
      $region22: #{tpu_custom_call.1} parent=11 // pred_check_branch
        %214 = sbr.rel (%p212) target = $region24
      $region23: #{tpu_custom_call.1} parent=11 // pred_region
        _
      $region24: #{tpu_custom_call.1} parent=11 // pred_fallthru
        _
      // Predicated region
      $region25: #{tpu_custom_call.1} parent=11 // pred_check
        %p215 = pneg %p123
      $region26: #{tpu_custom_call.1} parent=11 // pred_check_branch
        %217 = sbr.rel (%p215) target = $region28
      $region27: #{tpu_custom_call.1} parent=11 // pred_region
        _
      $region28: #{tpu_custom_call.1} parent=11 // pred_fallthru
        _
      // Predicated region
      $region29: #{tpu_custom_call.1} parent=11 // pred_check
        %p218 = pneg %p144
      $region30: #{tpu_custom_call.1} parent=11 // pred_check_branch
        %220 = sbr.rel (%p218) target = $region32
      $region31: #{tpu_custom_call.1} parent=11 // pred_region
        _
      $region32: #{tpu_custom_call.1} parent=11 // pred_fallthru
        _
      // Predicated region
      $region33: #{tpu_custom_call.1} parent=11 // pred_check
        %p221 = pneg %p165
      $region34: #{tpu_custom_call.1} parent=11 // pred_check_branch
        %223 = sbr.rel (%p221) target = $region36
      $region35: #{tpu_custom_call.1} parent=11 // pred_region
        _
      $region36: #{tpu_custom_call.1} parent=11 // pred_fallthru
        _
    $region12: #{tpu_custom_call.1} parent=5 // pred_fallthru
      _
    %p224 = scmp.lt.s32.totalorder %s13, 2
    // Predicated region
    $region37: #{tpu_custom_call.1} parent=5 // pred_check
      %p225 = pneg %p224
    $region38: #{tpu_custom_call.1} parent=5 // pred_check_branch
      %227 = sbr.rel (%p225) target = $region40
    $region39: #{tpu_custom_call.1} parent=5 // pred_region
      // Predicated region
      $region41: #{tpu_custom_call.1} parent=39 // pred_check
        %p228 = pneg %p33
      $region42: #{tpu_custom_call.1} parent=39 // pred_check_branch
        %230 = sbr.rel (%p228) target = $region44
      $region43: #{tpu_custom_call.1} parent=39 // pred_region
        %p231 = scmp.lt.s32.totalorder %s13, 1
        %s232 = scalar_select %p231, %s13, 1
        %s233 = smul.addr %s232, 4
        %s234 = scalar_lea.vmem %s0, %s233
      $region44: #{tpu_custom_call.1} parent=39 // pred_fallthru
        _
    $region40: #{tpu_custom_call.1} parent=5 // pred_fallthru
      _
    %p235 = scmp.le.s32.totalorder 1, %s13
    %p236 = scmp.lt.s32.totalorder %s13, 3
    %p237 = pnand %p235, %p236
    %p238 = pneg %p237
    // Predicated region
    $region45: #{tpu_custom_call.1} parent=5 // pred_check
      _
    $region46: #{tpu_custom_call.1} parent=5 // pred_check_branch
      %240 = sbr.rel (%p237) target = $region48
    $region47: #{tpu_custom_call.1} parent=5 // pred_region
      %s241 = ssub.s32 %s13, 1
      %p242 = scmp.lt.s32.totalorder %s18, 1
      %s243 = scalar_select %p242, %s18, 1
      %s244 = smul.addr %s243, 4
      %s245 = scalar_lea.vmem %s0, %s244
      %p246 = pneg %p39
      %p247 = pneg %p36
      %p248 = pneg %p60
      %p249 = pneg %p57
      %p250 = pneg %p81
      %p251 = pneg %p78
      %p252 = pneg %p102
      %p253 = pneg %p99
      %p254 = pneg %p123
      %p255 = pneg %p120
      %p256 = pneg %p144
      %p257 = pneg %p141
      %p258 = pneg %p165
      %p259 = pneg %p162
      %p260 = pneg %p191
      %p261 = pneg %p188
      %p262 = scmp.lt.s32.totalorder %s18, 1
      %s263 = scalar_select %p262, %s18, 1
      %s264 = smul.addr %s263, 2
      %s265 = smul.addr %s264, 8
      %s266 = scalar_lea.vmem %s7, %s265
      %p267 = scmp.lt.s32.totalorder %s18, 1
      %s268 = scalar_select %p267, %s18, 1
      %s269 = smul.addr %s268, 4
      %s270 = scalar_lea.vmem %s0, %s269
      %p271 = scmp.lt.s32.totalorder %s18, 1
      %s272 = scalar_select %p271, %s18, 1
      %s273 = smul.addr %s272, 2
      %s274 = smul.addr %s273, 8
      %s275 = scalar_lea.vmem %s7, %s274
      %v276 = vld [vmem:[%s270] sm:$0xf]
      %v277 = vlaneseq
      %v278 = vand.u32 %v277, 127
      %vm279 = vcmask 1047680
      %280 = vrot.lane.b32.xlu0 %v276, 16
      %v281 = vpop.permute.xlu0 %280
      %v282 = vsel %vm279, %v281, %v276
      %283 = vrot.lane.b32.xlu0 %v282, 16
      %v284 = vpop.permute.xlu0 %283
      %v285 = vsel %vm279, %v284, %v276
      %v286 = vadd.s32 %v278, 4294967295
      %vm287 = vcmp.ge.s32.totalorder %v286, 0
      %vm288 = vcmp.lt.s32.totalorder %v286, 16
      %vm289 = vmand %vm287, %vm288
      %291 = vrot.lane.b32.xlu0 %v285, 113
      %v292 = vpop.permute.xlu0 %291
      %v294 = vsel %vm289, %v292, 0.0
      %v295 = vld [vmem:[%s1] sm:$0xff]
      %s296 = scalar_lea.vmem %s1, 8
      %v297 = vld [vmem:[%s296] sm:$0xff]
      %vm298 = vcmask 31744
      %v300 = vsel %vm298, %v297, 0
      %vm302 = vcmask 1043456
      %v304 = vsel %vm302, %v276, 0
      %306 = vmatpush.msra.mxu0 0.0
      %307 = vmatpush.msra.mxu0 0.0
      %308 = vmatpush.msra.mxu0 0.0
      %309 = vmatpush.msra.mxu0 0.0
      %310 = vmatpush.msra.mxu0 0.0
      %311 = vmatpush.msra.mxu0 0.0
      %312 = vmatpush.msra.mxu0 0.0
      %313 = vmatpush.msra.mxu0 0.0
      %314 = vmatpush.msra.mxu0 0.0
      %315 = vmatpush.msra.mxu0 0.0
      %316 = vmatpush.msra.mxu0 0.0
      %317 = vmatpush.msra.mxu0 0.0
      %318 = vmatpush.msra.mxu0 0.0
      %319 = vmatpush.msra.mxu0 0.0
      %320 = vmatpush.msra.mxu0 0.0
      %321 = vmatpush.msra.mxu0 %v304
      %322 = vmatmul.f32.gmra.mxu0 %v300
      %v323 = vpop.f32.mrf.mxu0
      %v324 = vadd.f32 0.0, %v323
      %325 = vdwg.mxu0
      %v327 = vsel %vm298, %v295, 0
      %v330 = vsel %vm302, %v294, 0
      %332 = vmatpush.msra.mxu0 0.0
      %333 = vmatpush.msra.mxu0 0.0
      %334 = vmatpush.msra.mxu0 0.0
      %335 = vmatpush.msra.mxu0 0.0
      %336 = vmatpush.msra.mxu0 0.0
      %337 = vmatpush.msra.mxu0 0.0
      %338 = vmatpush.msra.mxu0 0.0
      %339 = vmatpush.msra.mxu0 0.0
      %340 = vmatpush.msra.mxu0 0.0
      %341 = vmatpush.msra.mxu0 0.0
      %342 = vmatpush.msra.mxu0 0.0
      %343 = vmatpush.msra.mxu0 0.0
      %344 = vmatpush.msra.mxu0 0.0
      %345 = vmatpush.msra.mxu0 0.0
      %346 = vmatpush.msra.mxu0 0.0
      %347 = vmatpush.msra.mxu0 %v330
      %348 = vmatmul.f32.gmra.mxu0 %v327
      %v349 = vpop.f32.mrf.mxu0
      %v350 = vadd.f32 %v324, %v349
      %351 = vdwg.mxu0
      %v352 = vadd.s32 %v278, 1
      %vm353 = vcmp.ge.s32.totalorder %v352, 0
      %vm354 = vcmp.lt.s32.totalorder %v352, 16
      %vm355 = vmand %vm353, %vm354
      %356 = vrot.lane.b32.xlu0 %v285, 127
      %v357 = vpop.permute.xlu0 %356
      %v359 = vsel %vm355, %v357, 0.0
      %s360 = scalar_lea.vmem %s1, 16
      %v361 = vld [vmem:[%s360] sm:$0xff]
      %v363 = vsel %vm298, %v361, 0
      %v366 = vsel %vm302, %v359, 0
      %368 = vmatpush.msra.mxu0 0.0
      %369 = vmatpush.msra.mxu0 0.0
      %370 = vmatpush.msra.mxu0 0.0
      %371 = vmatpush.msra.mxu0 0.0
      %372 = vmatpush.msra.mxu0 0.0
      %373 = vmatpush.msra.mxu0 0.0
      %374 = vmatpush.msra.mxu0 0.0
      %375 = vmatpush.msra.mxu0 0.0
      %376 = vmatpush.msra.mxu0 0.0
      %377 = vmatpush.msra.mxu0 0.0
      %378 = vmatpush.msra.mxu0 0.0
      %379 = vmatpush.msra.mxu0 0.0
      %380 = vmatpush.msra.mxu0 0.0
      %381 = vmatpush.msra.mxu0 0.0
      %382 = vmatpush.msra.mxu0 0.0
      %383 = vmatpush.msra.mxu0 %v366
      %384 = vmatmul.f32.gmra.mxu0 %v363
      %v385 = vpop.f32.mrf.mxu0
      %v386 = vadd.f32 0.0, %v385
      %387 = vdwg.mxu0
      %v388 = vadd.f32 %v350, %v386
      %v389 = vld [vmem:[%s2] sm:$0xff]
      %391 = vset.pattern.permute.xlu0 0
      %392 = vperm.xlu0 %391, %v389
      %v393 = vpop.permute.xlu0 %392
      %v395 = vadd.f32 %v388, %v393
      %vm396 = vcmp.gt.f32.partialorder %v395, 0.0
      %v397 = vmul.f32 %v395, 0.01
      %v398 = vsel %vm396, %v395, %v397
      %399 = vrot.lane.b32.xlu0 %v398, 16
      %v400 = vpop.permute.xlu0 %399
      %v401 = vsel %vm279, %v400, %v398
      %402 = vrot.lane.b32.xlu0 %v401, 16
      %v403 = vpop.permute.xlu0 %402
      %v404 = vsel %vm279, %v403, %v398
      %406 = vrot.lane.b32.xlu0 %v404, 127
      %v407 = vpop.permute.xlu0 %406
      %v409 = vmax.f32 %v398, %v407
      %v410 = vld [vmem:[%s3] sm:$0xff]
      %v411 = vld [vmem:[%s3 + $0x8] sm:$0xff]
      %vm412 = vcmask 130048
      %v414 = vsel %vm412, %v409, 0
      %416 = vmatpush.msra.mxu0 0.0
      %417 = vmatpush.msra.mxu0 0.0
      %418 = vmatpush.msra.mxu0 0.0
      %419 = vmatpush.msra.mxu0 0.0
      %420 = vmatpush.msra.mxu0 0.0
      %421 = vmatpush.msra.mxu0 0.0
      %422 = vmatpush.msra.mxu0 0.0
      %423 = vmatpush.msra.mxu0 0.0
      %424 = vmatpush.msra.mxu0 0.0
      %425 = vmatpush.msra.mxu0 0.0
      %426 = vmatpush.msra.mxu0 0.0
      %427 = vmatpush.msra.mxu0 0.0
      %428 = vmatpush.msra.mxu0 0.0
      %429 = vmatpush.msra.mxu0 0.0
      %430 = vmatpush.msra.mxu0 %v411
      %431 = vmatpush.msra.mxu0 %v410
      %432 = vmatmul.f32.gmra.mxu0 %v414
      %v433 = vpop.f32.mrf.mxu0
      %v434 = vadd.f32 0.0, %v433
      %435 = vdwg.mxu0
      %vm436 = vcmask 1047616
      %437 = vrot.lane.b32.xlu0 %v434, 8
      %v438 = vpop.permute.xlu0 %437
      %v439 = vsel %vm436, %v438, %v434
      %440 = vrot.lane.b32.xlu0 %v439, 8
      %v441 = vpop.permute.xlu0 %440
      %v442 = vsel %vm436, %v441, %v434
      %vm443 = vcmp.lt.s32.totalorder %v286, 8
      %vm444 = vmand %vm287, %vm443
      %446 = vrot.lane.b32.xlu0 %v442, 121
      %v447 = vpop.permute.xlu0 %446
      %v449 = vsel %vm444, %v447, 0.0
      %v450 = vld [vmem:[%s4] sm:$0xff]
      %v451 = vld [vmem:[%s4 + $0x8] sm:$0xff]
      %s452 = scalar_lea.vmem %s4, 16
      %v453 = vld [vmem:[%s452] sm:$0xff]
      %v454 = vld [vmem:[%s452 + $0x8] sm:$0xff]
      %vm455 = vcmask 64512
      %v457 = vsel %vm455, %v453, 0
      %v460 = vsel %vm455, %v454, 0
      %462 = vmatpush.msra.mxu0 0.0
      %463 = vmatpush.msra.mxu0 0.0
      %464 = vmatpush.msra.mxu0 0.0
      %465 = vmatpush.msra.mxu0 0.0
      %466 = vmatpush.msra.mxu0 0.0
      %467 = vmatpush.msra.mxu0 0.0
      %468 = vmatpush.msra.mxu0 0.0
      %469 = vmatpush.msra.mxu0 0.0
      %470 = vmatpush.msra.mxu0 0.0
      %471 = vmatpush.msra.mxu0 0.0
      %472 = vmatpush.msra.mxu0 0.0
      %473 = vmatpush.msra.mxu0 0.0
      %474 = vmatpush.msra.mxu0 0.0
      %475 = vmatpush.msra.mxu0 0.0
      %476 = vmatpush.msra.mxu0 0.0
      %477 = vmatpush.msra.mxu0 %v434
      %478 = vmatmul.f32.gmra.mxu0 %v457
      %v479 = vpop.f32.mrf.mxu0
      %v480 = vadd.f32 0.0, %v479
      %481 = vmatmul.f32.gmra.mxu0 %v460
      %v482 = vpop.f32.mrf.mxu0
      %v483 = vadd.f32 0.0, %v482
      %484 = vdwg.mxu0
      %v486 = vsel %vm455, %v450, 0
      %v489 = vsel %vm455, %v451, 0
      %491 = vmatpush.msra.mxu0 0.0
      %492 = vmatpush.msra.mxu0 0.0
      %493 = vmatpush.msra.mxu0 0.0
      %494 = vmatpush.msra.mxu0 0.0
      %495 = vmatpush.msra.mxu0 0.0
      %496 = vmatpush.msra.mxu0 0.0
      %497 = vmatpush.msra.mxu0 0.0
      %498 = vmatpush.msra.mxu0 0.0
      %499 = vmatpush.msra.mxu0 0.0
      %500 = vmatpush.msra.mxu0 0.0
      %501 = vmatpush.msra.mxu0 0.0
      %502 = vmatpush.msra.mxu0 0.0
      %503 = vmatpush.msra.mxu0 0.0
      %504 = vmatpush.msra.mxu0 0.0
      %505 = vmatpush.msra.mxu0 0.0
      %506 = vmatpush.msra.mxu0 %v449
      %507 = vmatmul.f32.gmra.mxu0 %v486
      %v508 = vpop.f32.mrf.mxu0
      %v509 = vadd.f32 %v480, %v508
      %510 = vmatmul.f32.gmra.mxu0 %v489
      %v511 = vpop.f32.mrf.mxu0
      %v512 = vadd.f32 %v483, %v511
      %513 = vdwg.mxu0
      %vm514 = vcmp.lt.s32.totalorder %v352, 8
      %vm515 = vmand %vm353, %vm514
      %516 = vrot.lane.b32.xlu0 %v442, 127
      %v517 = vpop.permute.xlu0 %516
      %v519 = vsel %vm515, %v517, 0.0
      %s520 = scalar_lea.vmem %s4, 32
      %v521 = vld [vmem:[%s520] sm:$0xff]
      %v522 = vld [vmem:[%s520 + $0x8] sm:$0xff]
      %v524 = vsel %vm455, %v521, 0
      %v527 = vsel %vm455, %v522, 0
      %529 = vmatpush.msra.mxu0 0.0
      %530 = vmatpush.msra.mxu0 0.0
      %531 = vmatpush.msra.mxu0 0.0
      %532 = vmatpush.msra.mxu0 0.0
      %533 = vmatpush.msra.mxu0 0.0
      %534 = vmatpush.msra.mxu0 0.0
      %535 = vmatpush.msra.mxu0 0.0
      %536 = vmatpush.msra.mxu0 0.0
      %537 = vmatpush.msra.mxu0 0.0
      %538 = vmatpush.msra.mxu0 0.0
      %539 = vmatpush.msra.mxu0 0.0
      %540 = vmatpush.msra.mxu0 0.0
      %541 = vmatpush.msra.mxu0 0.0
      %542 = vmatpush.msra.mxu0 0.0
      %543 = vmatpush.msra.mxu0 0.0
      %544 = vmatpush.msra.mxu0 %v519
      %545 = vmatmul.f32.gmra.mxu0 %v524
      %v546 = vpop.f32.mrf.mxu0
      %v547 = vadd.f32 0.0, %v546
      %548 = vmatmul.f32.gmra.mxu0 %v527
      %v549 = vpop.f32.mrf.mxu0
      %v550 = vadd.f32 0.0, %v549
      %551 = vdwg.mxu0
      %v552 = vadd.f32 %v509, %v547
      %v553 = vadd.f32 %v512, %v550
      %v554 = vld [vmem:[%s5] sm:$0xff]
      %v555 = vld [vmem:[%s5 + $0x8] sm:$0xff]
      %557 = vset.pattern.permute.xlu0 0
      %558 = vperm.xlu0 %557, %v554
      %v559 = vpop.permute.xlu0 %558
      %562 = vset.pattern.permute.xlu0 0
      %563 = vperm.xlu0 %562, %v555
      %v564 = vpop.permute.xlu0 %563
      %v566 = vadd.f32 %v552, %v559
      %v567 = vadd.f32 %v553, %v564
      %vm568 = vcmp.gt.f32.partialorder %v566, 0.0
      %vm569 = vcmp.gt.f32.partialorder %v567, 0.0
      %v570 = vmul.f32 %v566, 0.01
      %v571 = vmul.f32 %v567, 0.01
      %v572 = vsel %vm568, %v566, %v570
      %v573 = vsel %vm569, %v567, %v571
      %574 = vrot.lane.b32.xlu0 %v572, 8
      %v575 = vpop.permute.xlu0 %574
      %v576 = vsel %vm436, %v575, %v572
      %577 = vrot.lane.b32.xlu0 %v573, 8
      %v578 = vpop.permute.xlu0 %577
      %v579 = vsel %vm436, %v578, %v573
      %580 = vrot.lane.b32.xlu0 %v576, 8
      %v581 = vpop.permute.xlu0 %580
      %582 = vrot.lane.b32.xlu0 %v579, 8
      %v583 = vpop.permute.xlu0 %582
      %v584 = vsel %vm436, %v581, %v572
      %v585 = vsel %vm436, %v583, %v573
      %588 = vrot.lane.b32.xlu0 %v584, 127
      %v589 = vpop.permute.xlu0 %588
      %590 = vrot.lane.b32.xlu0 %v585, 127
      %v591 = vpop.permute.xlu0 %590
      %v594 = vmax.f32 %v572, %v589
      %v595 = vmax.f32 %v573, %v591
      %v596 = vld [vmem:[%s6] sm:$0xff]
      %v598 = vsel %vm455, %v594, 0
      %v601 = vsel %vm455, %v595, 0
      %603 = vmatpush.msra.mxu0 0.0
      %604 = vmatpush.msra.mxu0 0.0
      %605 = vmatpush.msra.mxu0 0.0
      %606 = vmatpush.msra.mxu0 0.0
      %607 = vmatpush.msra.mxu0 0.0
      %608 = vmatpush.msra.mxu0 0.0
      %609 = vmatpush.msra.mxu0 0.0
      %610 = vmatpush.msra.mxu0 0.0
      %611 = vmatpush.msra.mxu0 0.0
      %612 = vmatpush.msra.mxu0 0.0
      %613 = vmatpush.msra.mxu0 0.0
      %614 = vmatpush.msra.mxu0 0.0
      %615 = vmatpush.msra.mxu0 0.0
      %616 = vmatpush.msra.mxu0 0.0
      %617 = vmatpush.msra.mxu0 0.0
      %618 = vmatpush.msra.mxu0 %v596
      %619 = vmatmul.f32.gmra.mxu0 %v598
      %v620 = vpop.f32.mrf.mxu0
      %v621 = vadd.f32 0.0, %v620
      %622 = vmatmul.f32.gmra.mxu0 %v601
      %v623 = vpop.f32.mrf.mxu0
      %v624 = vadd.f32 0.0, %v623
      %625 = vdwg.mxu0
      %626 = vst.msk [vmem:[%s275] sm:$0xff] %vm298, %v621
      %627 = vst.msk [vmem:[%s275 + $0x8] sm:$0xff] %vm298, %v624
      %p628 = scmp.lt.s32.totalorder %s18, 1
      %s629 = scalar_select %p628, %s18, 1
      %s630 = smul.addr %s629, 2
      %s631 = smul.addr %s630, 8
      %s632 = scalar_lea.vmem %s7, %s631
      // Predicated region
      $region49: #{tpu_custom_call.1} parent=47 // pred_check
        %p633 = pneg %p188
      $region50: #{tpu_custom_call.1} parent=47 // pred_check_branch
        %635 = sbr.rel (%p633) target = $region52
      $region51: #{tpu_custom_call.1} parent=47 // pred_region
        _
      $region52: #{tpu_custom_call.1} parent=47 // pred_fallthru
        _
    $region48: #{tpu_custom_call.1} parent=5 // pred_fallthru
      _
    %p636 = scmp.le.s32.totalorder 2, %s13
    // Predicated region
    $region53: #{tpu_custom_call.1} parent=5 // pred_check
      %p637 = pneg %p636
    $region54: #{tpu_custom_call.1} parent=5 // pred_check_branch
      %639 = sbr.rel (%p637) target = $region56
    $region55: #{tpu_custom_call.1} parent=5 // pred_region
      %s640 = ssub.s32 %s13, 2
      // Predicated region
      $region57: #{tpu_custom_call.1} parent=55 // pred_check
        %p641 = pneg %p194
      $region58: #{tpu_custom_call.1} parent=55 // pred_check_branch
        %643 = sbr.rel (%p641) target = $region60
      $region59: #{tpu_custom_call.1} parent=55 // pred_region
        %p644 = scmp.lt.s32.totalorder %s19, 1
        %s645 = scalar_select %p644, %s19, 1
        %s646 = smul.addr %s645, 2
        %s647 = smul.addr %s646, 8
        %s648 = scalar_lea.vmem %s7, %s647
      $region60: #{tpu_custom_call.1} parent=55 // pred_fallthru
        _
    $region56: #{tpu_custom_call.1} parent=5 // pred_fallthru
      _
  $region6: #{tpu_custom_call.1} parent=0 // loop_footer
    %s17 = sadd.s32 1, %s13
  $region7: #{tpu_custom_call.1} parent=0 // loop_footer_branch
    %12 = sbr.rel target = $region3
  $region8: #{tpu_custom_call.1} parent=0 // loop_exit
    _

</llo_original>
